<compile_context>
chip_gen: v6e
topology: v6e:2x2x1
jax: 0.10.0
libtpu: 0.0.40
codegen_flags: <defaults>
</compile_context>

<pallas_src>
import functools

import jax
import jax.numpy as jnp
from jax.experimental import pallas as pl
from jax.experimental.pallas import tpu as pltpu


def _attention_kernel(x_ref, wq_ref, bq_ref, wk_ref, bk_ref, wv_ref, bv_ref,
                      o_ref, *, batch, length, scale):
    # x_ref: (B*L, C) — batch folded into the matmul M dimension.
    x_bf = x_ref[...].astype(jnp.bfloat16)
    wq = wq_ref[...].astype(jnp.bfloat16)
    wk = wk_ref[...].astype(jnp.bfloat16)
    wv = wv_ref[...].astype(jnp.bfloat16)

    # Linear projections: bf16 MXU inputs, f32 accumulation, f32 bias add.
    q = jnp.dot(x_bf, wq, preferred_element_type=jnp.float32) + bq_ref[...]
    k = jnp.dot(x_bf, wk, preferred_element_type=jnp.float32) + bk_ref[...]
    v = jnp.dot(x_bf, wv, preferred_element_type=jnp.float32) + bv_ref[...]

    # Fold the softmax scale into q (scaling (B*L, Dk) is far cheaper than (L, L)).
    q = q * scale

    dk = q.shape[-1]
    c = v.shape[-1]
    q3 = q.reshape(batch, length, dk).astype(jnp.bfloat16)
    k3 = k.reshape(batch, length, dk).astype(jnp.bfloat16)
    v3 = v.reshape(batch, length, c).astype(jnp.bfloat16)

    # Scores: contract on the feature dim directly — no explicit K transpose.
    s = jnp.einsum("bld,bmd->blm", q3, k3,
                   preferred_element_type=jnp.float32)          # (B, L, L) f32

    # Numerically-stable softmax in f32; reciprocal on the EUP.
    s = s - jnp.max(s, axis=-1, keepdims=True)
    p = jnp.exp(s)
    p = p * pl.reciprocal(jnp.sum(p, axis=-1, keepdims=True), approx=True)

    out = jnp.einsum("blm,bmc->blc", p.astype(jnp.bfloat16), v3,
                     preferred_element_type=jnp.float32)         # (B, L, C) f32

    o_ref[...] = out.astype(o_ref.dtype)


def self_attention(x, wq, bq, wk, bk, wv, bv):
    """x: [B, L, C] float32. Weights pre-transposed to (in, out): y = x @ W + b."""
    B, L, C = x.shape
    Dk = wq.shape[1]
    scale = float(Dk) ** (-0.5)

    kernel = functools.partial(_attention_kernel, batch=B, length=L, scale=scale)

    # Fold batch into the M dim of the projections (reshape is free in the wrapper).
    x2d = x.reshape(B * L, C)

    vmem = pltpu.MemorySpace.VMEM
    return pl.pallas_call(
        kernel,
        out_shape=jax.ShapeDtypeStruct((B, L, C), x.dtype),
        in_specs=[pl.BlockSpec(memory_space=vmem)] * 7,
        out_specs=pl.BlockSpec(memory_space=vmem),
    )(x2d, wq, bq, wk, bk, wv, bv)


def reference_self_attention(x, wq, bq, wk, bk, wv, bv):
    """Pure-JAX f32 reference mirroring the PyTorch forward."""
    Dk = wq.shape[1]
    scale = float(Dk) ** (-0.5)
    q = x @ wq + bq
    k = x @ wk + bk
    v = x @ wv + bv
    attn = jnp.einsum("bld,bmd->blm", q, k) * scale
    attn = jax.nn.softmax(attn, axis=-1)
    return jnp.einsum("blm,bmc->blc", attn, v)


if __name__ == "__main__":
    # Shapes consistent with the module: x is (batch, length, channels).
    B, L, C = 2, 8, 32
    Dk = C // 8

    key = jax.random.PRNGKey(0)
    kx, kwq, kbq, kwk, kbk, kwv, kbv = jax.random.split(key, 7)

    x = jax.random.normal(kx, (B, L, C), dtype=jnp.float32)

    # nn.Linear weight shape is (out, in); store transposed to (in, out) so the
    # kernel computes x @ W + b.
    wq = jax.random.normal(kwq, (C, Dk), dtype=jnp.float32) * 0.1
    bq = jax.random.normal(kbq, (1, Dk), dtype=jnp.float32) * 0.1
    wk = jax.random.normal(kwk, (C, Dk), dtype=jnp.float32) * 0.1
    bk = jax.random.normal(kbk, (1, Dk), dtype=jnp.float32) * 0.1
    wv = jax.random.normal(kwv, (C, C), dtype=jnp.float32) * 0.1
    bv = jax.random.normal(kbv, (1, C), dtype=jnp.float32) * 0.1

    out = self_attention(x, wq, bq, wk, bk, wv, bv)
    out = jax.block_until_ready(out)

    ref = reference_self_attention(x, wq, bq, wk, bk, wv, bv)
    assert out.shape == (B, L, C)
    # bf16 MXU inputs (f32 accumulate) loosen the tolerance vs the f32 reference.
    assert jnp.allclose(out, ref, atol=2e-2, rtol=2e-2), "mismatch vs reference"

    print("KERNEL_OK")
</pallas_src>

<mosaic_0001>
module attributes {stable_mosaic.version = 11 : i64} {
  func.func @_attention_kernel(%arg0: memref<16x32xf32, #tpu.memory_space<vmem>>, %arg1: memref<32x4xf32, #tpu.memory_space<vmem>>, %arg2: memref<1x4xf32, #tpu.memory_space<vmem>>, %arg3: memref<32x4xf32, #tpu.memory_space<vmem>>, %arg4: memref<1x4xf32, #tpu.memory_space<vmem>>, %arg5: memref<32x32xf32, #tpu.memory_space<vmem>>, %arg6: memref<1x32xf32, #tpu.memory_space<vmem>>, %arg7: memref<2x8x32xf32, #tpu.memory_space<vmem>>) attributes {dimension_semantics = [], scalar_prefetch = 0 : i64, scratch_operands = 0 : i64, tpu.core_type = #tpu.core_type<tc>} {
    %c0 = arith.constant 0 : index
    %c0_0 = arith.constant 0 : index
    %0 = vector.load %arg0[%c0, %c0_0] : memref<16x32xf32, #tpu.memory_space<vmem>>, vector<16x32xf32>
    %1 = arith.truncf %0 : vector<16x32xf32> to vector<16x32xbf16>
    %c0_1 = arith.constant 0 : index
    %c0_2 = arith.constant 0 : index
    %2 = vector.load %arg1[%c0_1, %c0_2] : memref<32x4xf32, #tpu.memory_space<vmem>>, vector<32x4xf32>
    %3 = arith.truncf %2 : vector<32x4xf32> to vector<32x4xbf16>
    %c0_3 = arith.constant 0 : index
    %c0_4 = arith.constant 0 : index
    %4 = vector.load %arg3[%c0_3, %c0_4] : memref<32x4xf32, #tpu.memory_space<vmem>>, vector<32x4xf32>
    %5 = arith.truncf %4 : vector<32x4xf32> to vector<32x4xbf16>
    %c0_5 = arith.constant 0 : index
    %c0_6 = arith.constant 0 : index
    %6 = vector.load %arg5[%c0_5, %c0_6] : memref<32x32xf32, #tpu.memory_space<vmem>>, vector<32x32xf32>
    %7 = arith.truncf %6 : vector<32x32xf32> to vector<32x32xbf16>
    %cst = arith.constant dense<0.000000e+00> : vector<16x4xf32>
    %8 = tpu.matmul %1, %3, %cst {dimension_numbers = #tpu.dot_dimension_numbers<[1], [0], [0], [1], [0, 0, 1, 1], [], []>} : vector<16x32xbf16>, vector<32x4xbf16>, vector<16x4xf32> -> vector<16x4xf32>
    %c0_7 = arith.constant 0 : index
    %c0_8 = arith.constant 0 : index
    %9 = vector.load %arg2[%c0_7, %c0_8] : memref<1x4xf32, #tpu.memory_space<vmem>>, vector<1x4xf32>
    %10 = vector.broadcast %9 : vector<1x4xf32> to vector<16x4xf32>
    %11 = arith.addf %8, %10 : vector<16x4xf32>
    %cst_9 = arith.constant dense<0.000000e+00> : vector<16x4xf32>
    %12 = tpu.matmul %1, %5, %cst_9 {dimension_numbers = #tpu.dot_dimension_numbers<[1], [0], [0], [1], [0, 0, 1, 1], [], []>} : vector<16x32xbf16>, vector<32x4xbf16>, vector<16x4xf32> -> vector<16x4xf32>
    %c0_10 = arith.constant 0 : index
    %c0_11 = arith.constant 0 : index
    %13 = vector.load %arg4[%c0_10, %c0_11] : memref<1x4xf32, #tpu.memory_space<vmem>>, vector<1x4xf32>
    %14 = vector.broadcast %13 : vector<1x4xf32> to vector<16x4xf32>
    %15 = arith.addf %12, %14 : vector<16x4xf32>
    %cst_12 = arith.constant dense<0.000000e+00> : vector<16x32xf32>
    %16 = tpu.matmul %1, %7, %cst_12 {dimension_numbers = #tpu.dot_dimension_numbers<[1], [0], [0], [1], [0, 0, 1, 1], [], []>} : vector<16x32xbf16>, vector<32x32xbf16>, vector<16x32xf32> -> vector<16x32xf32>
    %c0_13 = arith.constant 0 : index
    %c0_14 = arith.constant 0 : index
    %17 = vector.load %arg6[%c0_13, %c0_14] : memref<1x32xf32, #tpu.memory_space<vmem>>, vector<1x32xf32>
    %18 = vector.broadcast %17 : vector<1x32xf32> to vector<16x32xf32>
    %19 = arith.addf %16, %18 : vector<16x32xf32>
    %cst_15 = arith.constant 5.000000e-01 : f32
    %20 = vector.broadcast %cst_15 : f32 to vector<16x4xf32>
    %21 = arith.mulf %11, %20 : vector<16x4xf32>
    %22 = vector.shape_cast %21 : vector<16x4xf32> to vector<2x8x4xf32>
    %23 = arith.truncf %22 : vector<2x8x4xf32> to vector<2x8x4xbf16>
    %24 = vector.shape_cast %15 : vector<16x4xf32> to vector<2x8x4xf32>
    %25 = arith.truncf %24 : vector<2x8x4xf32> to vector<2x8x4xbf16>
    %26 = vector.shape_cast %19 : vector<16x32xf32> to vector<2x8x32xf32>
    %27 = arith.truncf %26 : vector<2x8x32xf32> to vector<2x8x32xbf16>
    "tpu.trace_start"() <{level = 10 : i32, message = "bld,bmd->blm"}> : () -> ()
    %cst_16 = arith.constant dense<0.000000e+00> : vector<2x8x8xf32>
    %28 = tpu.matmul %23, %25, %cst_16 {dimension_numbers = #tpu.dot_dimension_numbers<[2], [2], [1], [1], [0, 0, 0, 1, 1, 1], [0], [0]>} : vector<2x8x4xbf16>, vector<2x8x4xbf16>, vector<2x8x8xf32> -> vector<2x8x8xf32>
    "tpu.trace_stop"() : () -> ()
    %cst_17 = arith.constant dense<0xFF800000> : vector<2x8xf32>
    %29 = vector.multi_reduction <maximumf>, %28, %cst_17 [2] : vector<2x8x8xf32> to vector<2x8xf32>
    %30 = vector.shape_cast %29 : vector<2x8xf32> to vector<2x8x1xf32>
    %31 = vector.broadcast %30 : vector<2x8x1xf32> to vector<2x8x8xf32>
    %32 = arith.subf %28, %31 : vector<2x8x8xf32>
    %33 = math.exp %32 : vector<2x8x8xf32>
    %cst_18 = arith.constant dense<0.000000e+00> : vector<2x8xf32>
    %34 = vector.multi_reduction <add>, %33, %cst_18 [2] : vector<2x8x8xf32> to vector<2x8xf32>
    %35 = vector.shape_cast %34 : vector<2x8xf32> to vector<2x8x1xf32>
    %36 = tpu.reciprocal %35 {approx = true} : vector<2x8x1xf32> -> vector<2x8x1xf32>
    %37 = vector.broadcast %36 : vector<2x8x1xf32> to vector<2x8x8xf32>
    %38 = arith.mulf %33, %37 : vector<2x8x8xf32>
    %39 = arith.truncf %38 : vector<2x8x8xf32> to vector<2x8x8xbf16>
    "tpu.trace_start"() <{level = 10 : i32, message = "blm,bmc->blc"}> : () -> ()
    %cst_19 = arith.constant dense<0.000000e+00> : vector<2x8x32xf32>
    %40 = tpu.matmul %39, %27, %cst_19 {dimension_numbers = #tpu.dot_dimension_numbers<[2], [1], [1], [2], [0, 0, 0, 1, 1, 2], [0], [0]>} : vector<2x8x8xbf16>, vector<2x8x32xbf16>, vector<2x8x32xf32> -> vector<2x8x32xf32>
    "tpu.trace_stop"() : () -> ()
    %c0_20 = arith.constant 0 : index
    %c0_21 = arith.constant 0 : index
    %c0_22 = arith.constant 0 : index
    %41 = vector.load %arg7[%c0_20, %c0_21, %c0_22] : memref<2x8x32xf32, #tpu.memory_space<vmem>>, vector<2x8x32xf32>
    tpu.vector_store %arg7[%c0_20, %c0_21, %c0_22], %40 {strides = array<i32>} : memref<2x8x32xf32, #tpu.memory_space<vmem>>, vector<2x8x32xf32>,
    return
  }
}

</mosaic_0001>

<llo_original>
// kernel: tpu_custom_call.1
$region0: #{tpu_custom_call.1}
  #allocation0 [shape = 'u32[]', space=smem, size = 0x4, offset = 0x4, fixed_abs, tag = 'smem constant byte address 0x4 - core index']
  #allocation1 [shape = 'u32[144,128]{1,0:T(1,128)}', space=vmem, size = 0x12000, scoped, tag = 'internal scratch']
  %s0 = inlined_call_operand.vmem [shape: f32[16,32], index: 0, kind: input, shape index: {}]
  %s1 = inlined_call_operand.vmem [shape: f32[32,4], index: 1, kind: input, shape index: {}]
  %s2 = inlined_call_operand.vmem [shape: f32[1,4], index: 2, kind: input, shape index: {}]
  %s3 = inlined_call_operand.vmem [shape: f32[32,4], index: 3, kind: input, shape index: {}]
  %s4 = inlined_call_operand.vmem [shape: f32[1,4], index: 4, kind: input, shape index: {}]
  %s5 = inlined_call_operand.vmem [shape: f32[32,32], index: 5, kind: input, shape index: {}]
  %s6 = inlined_call_operand.vmem [shape: f32[1,32], index: 6, kind: input, shape index: {}]
  %s7 = inlined_call_operand.hbm [shape: f32[2,8,32], index: 7, kind: output, shape index: {}]
  %s8 = sld [smem:[#allocation0]]
  $region38: #{tpu_custom_call.1} parent=0
    _
  %s10 = ssub.s32 1, %s8
  %s11 = scalar_select 0, %s10, %s8
  $region1: #{tpu_custom_call.1} parent=0
    #allocation2 [shape = 'u8[8192]{0}', space=vmem, size = 0x2000, scoped, tag = 'output window, operand 0, single buffered']
    #allocation3 [shape = 's32[1]{0}', space=sflag, size = 0x4, scoped, tag = 'scoped memory for tpu_custom_call.1']
    %12 = vsyncpa [#allocation3], 0
    // Predicated region
    $region2: #{tpu_custom_call.1} parent=1 // pred_check
      _
    $region3: #{tpu_custom_call.1} parent=1 // pred_check_branch
      %14 = sbr.rel (0) target = $region5
    $region4: #{tpu_custom_call.1} parent=1 // pred_region
      _
    $region5: #{tpu_custom_call.1} parent=1 // pred_fallthru
      _
    // Predicated region
    $region6: #{tpu_custom_call.1} parent=1 // pred_check
      _
    $region7: #{tpu_custom_call.1} parent=1 // pred_check_branch
      %16 = sbr.rel (0) target = $region9
    $region8: #{tpu_custom_call.1} parent=1 // pred_region
      _
    $region9: #{tpu_custom_call.1} parent=1 // pred_fallthru
      _
    // Predicated region
    $region10: #{tpu_custom_call.1} parent=1 // pred_check
      _
    $region11: #{tpu_custom_call.1} parent=1 // pred_check_branch
      %18 = sbr.rel (0) target = $region13
    $region12: #{tpu_custom_call.1} parent=1 // pred_region
      _
    $region13: #{tpu_custom_call.1} parent=1 // pred_fallthru
      _
    // Predicated region
    $region14: #{tpu_custom_call.1} parent=1 // pred_check
      _
    $region15: #{tpu_custom_call.1} parent=1 // pred_check_branch
      %20 = sbr.rel (0) target = $region17
    $region16: #{tpu_custom_call.1} parent=1 // pred_region
      _
    $region17: #{tpu_custom_call.1} parent=1 // pred_fallthru
      _
    // Predicated region
    $region18: #{tpu_custom_call.1} parent=1 // pred_check
      _
    $region19: #{tpu_custom_call.1} parent=1 // pred_check_branch
      %22 = sbr.rel (0) target = $region21
    $region20: #{tpu_custom_call.1} parent=1 // pred_region
      _
    $region21: #{tpu_custom_call.1} parent=1 // pred_fallthru
      _
    // Predicated region
    $region22: #{tpu_custom_call.1} parent=1 // pred_check
      _
    $region23: #{tpu_custom_call.1} parent=1 // pred_check_branch
      %24 = sbr.rel (0) target = $region25
    $region24: #{tpu_custom_call.1} parent=1 // pred_region
      _
    $region25: #{tpu_custom_call.1} parent=1 // pred_fallthru
      _
    // Predicated region
    $region26: #{tpu_custom_call.1} parent=1 // pred_check
      _
    $region27: #{tpu_custom_call.1} parent=1 // pred_check_branch
      %26 = sbr.rel (0) target = $region29
    $region28: #{tpu_custom_call.1} parent=1 // pred_region
      _
    $region29: #{tpu_custom_call.1} parent=1 // pred_fallthru
      _
    %v28 = vld [vmem:[%s0] sm:$0xff]
    %v29 = vld [vmem:[%s0 + $0x8] sm:$0xff]
    %v30 = vpack.c.bf16 %v29, %v28
    %v31 = vld [vmem:[%s1] sm:$0xff]
    %v32 = vld [vmem:[%s1 + $0x8] sm:$0xff]
    %v33 = vld [vmem:[%s1 + $0x10] sm:$0xff]
    %v34 = vld [vmem:[%s1 + $0x18] sm:$0xff]
    %v35 = vpack.c.bf16 %v32, %v31
    %v36 = vpack.c.bf16 %v34, %v33
    %v37 = vld [vmem:[%s3] sm:$0xff]
    %v38 = vld [vmem:[%s3 + $0x8] sm:$0xff]
    %v39 = vld [vmem:[%s3 + $0x10] sm:$0xff]
    %v40 = vld [vmem:[%s3 + $0x18] sm:$0xff]
    %v41 = vpack.c.bf16 %v38, %v37
    %v42 = vpack.c.bf16 %v40, %v39
    %v43 = vld [vmem:[%s5] sm:$0xff]
    %v44 = vld [vmem:[%s5 + $0x8] sm:$0xff]
    %v45 = vld [vmem:[%s5 + $0x10] sm:$0xff]
    %v46 = vld [vmem:[%s5 + $0x18] sm:$0xff]
    %v47 = vpack.c.bf16 %v44, %v43
    %v48 = vpack.c.bf16 %v46, %v45
    %v49 = vld [vmem:[%s2] sm:$0x1]
    %v51 = vlaneseq
    %v52 = vshrl.u32 %v51, 7
    %v53 = vsub.s32 0, %v52
    %v54 = vrot.slane %v49, %v53
    %vm56 = vcmask 261120
    %v58 = vsel %vm56, %v30, 0
    %60 = vmatprep.subr.bf16.mxu0 0
    %61 = vmatpush1.bf16.msra.mxu0 0
    %62 = vmatprep.subr.bf16.mxu0 0
    %63 = vmatpush1.bf16.msra.mxu0 0
    %64 = vmatprep.subr.bf16.mxu0 0
    %65 = vmatpush1.bf16.msra.mxu0 0
    %66 = vmatprep.subr.bf16.mxu0 0
    %67 = vmatpush1.bf16.msra.mxu0 0
    %68 = vmatprep.subr.bf16.mxu0 0
    %69 = vmatpush1.bf16.msra.mxu0 0
    %70 = vmatprep.subr.bf16.mxu0 0
    %71 = vmatpush1.bf16.msra.mxu0 0
    %72 = vmatprep.subr.bf16.mxu0 0
    %73 = vmatpush1.bf16.msra.mxu0 %v36
    %74 = vmatprep.subr.bf16.mxu0 0
    %75 = vmatpush1.bf16.msra.mxu0 %v35
    %76 = vmatprep.subr.bf16.mxu0 0
    %77 = vmatpush2.bf16.msra.mxu0 0
    %78 = vmatprep.subr.bf16.mxu0 0
    %79 = vmatpush2.bf16.msra.mxu0 0
    %80 = vmatprep.subr.bf16.mxu0 0
    %81 = vmatpush2.bf16.msra.mxu0 0
    %82 = vmatprep.subr.bf16.mxu0 0
    %83 = vmatpush2.bf16.msra.mxu0 0
    %84 = vmatprep.subr.bf16.mxu0 0
    %85 = vmatpush2.bf16.msra.mxu0 0
    %86 = vmatprep.subr.bf16.mxu0 0
    %87 = vmatpush2.bf16.msra.mxu0 0
    %88 = vmatprep.subr.bf16.mxu0 0
    %89 = vmatpush2.bf16.msra.mxu0 0
    %90 = vmatprep.subr.bf16.mxu0 0
    %91 = vmatpush2.bf16.msra.mxu0 0
    %92 = vmatprep.mubr.bf16.mxu0 0
    %93 = vmatmul.mubr.bf16.gmra.mxu0 %v58
    %v94 = vpop.f32.mrf.mxu0
    %v95 = vadd.f32 %v54, %v94
    %v96 = vpop.f32.mrf.mxu0
    %v97 = vpop.f32.mrf.mxu0
    %v98 = vadd.f32 %v54, %v97
    %v99 = vpop.f32.mrf.mxu0
    %100 = vdwg.mxu0
    %v101 = vld [vmem:[%s4] sm:$0x1]
    %v103 = vlaneseq
    %v104 = vshrl.u32 %v103, 7
    %v105 = vsub.s32 0, %v104
    %v106 = vrot.slane %v101, %v105
    %108 = vmatprep.subr.bf16.mxu0 0
    %109 = vmatpush1.bf16.msra.mxu0 0
    %110 = vmatprep.subr.bf16.mxu0 0
    %111 = vmatpush1.bf16.msra.mxu0 0
    %112 = vmatprep.subr.bf16.mxu0 0
    %113 = vmatpush1.bf16.msra.mxu0 0
    %114 = vmatprep.subr.bf16.mxu0 0
    %115 = vmatpush1.bf16.msra.mxu0 0
    %116 = vmatprep.subr.bf16.mxu0 0
    %117 = vmatpush1.bf16.msra.mxu0 0
    %118 = vmatprep.subr.bf16.mxu0 0
    %119 = vmatpush1.bf16.msra.mxu0 0
    %120 = vmatprep.subr.bf16.mxu0 0
    %121 = vmatpush1.bf16.msra.mxu0 %v42
    %122 = vmatprep.subr.bf16.mxu0 0
    %123 = vmatpush1.bf16.msra.mxu0 %v41
    %124 = vmatprep.subr.bf16.mxu0 0
    %125 = vmatpush2.bf16.msra.mxu0 0
    %126 = vmatprep.subr.bf16.mxu0 0
    %127 = vmatpush2.bf16.msra.mxu0 0
    %128 = vmatprep.subr.bf16.mxu0 0
    %129 = vmatpush2.bf16.msra.mxu0 0
    %130 = vmatprep.subr.bf16.mxu0 0
    %131 = vmatpush2.bf16.msra.mxu0 0
    %132 = vmatprep.subr.bf16.mxu0 0
    %133 = vmatpush2.bf16.msra.mxu0 0
    %134 = vmatprep.subr.bf16.mxu0 0
    %135 = vmatpush2.bf16.msra.mxu0 0
    %136 = vmatprep.subr.bf16.mxu0 0
    %137 = vmatpush2.bf16.msra.mxu0 0
    %138 = vmatprep.subr.bf16.mxu0 0
    %139 = vmatpush2.bf16.msra.mxu0 0
    %140 = vmatprep.mubr.bf16.mxu0 0
    %141 = vmatmul.mubr.bf16.gmra.mxu0 %v58
    %v142 = vpop.f32.mrf.mxu0
    %v143 = vadd.f32 %v106, %v142
    %v144 = vpop.f32.mrf.mxu0
    %v145 = vpop.f32.mrf.mxu0
    %v146 = vadd.f32 %v106, %v145
    %v147 = vpop.f32.mrf.mxu0
    %148 = vdwg.mxu0
    %v149 = vld [vmem:[%s6] sm:$0x1]
    %v151 = vlaneseq
    %v152 = vshrl.u32 %v151, 7
    %v153 = vsub.s32 0, %v152
    %v154 = vrot.slane %v149, %v153
    %156 = vmatprep.subr.bf16.mxu0 0
    %157 = vmatpush1.bf16.msra.mxu0 0
    %158 = vmatprep.subr.bf16.mxu0 0
    %159 = vmatpush1.bf16.msra.mxu0 0
    %160 = vmatprep.subr.bf16.mxu0 0
    %161 = vmatpush1.bf16.msra.mxu0 0
    %162 = vmatprep.subr.bf16.mxu0 0
    %163 = vmatpush1.bf16.msra.mxu0 0
    %164 = vmatprep.subr.bf16.mxu0 0
    %165 = vmatpush1.bf16.msra.mxu0 0
    %166 = vmatprep.subr.bf16.mxu0 0
    %167 = vmatpush1.bf16.msra.mxu0 0
    %168 = vmatprep.subr.bf16.mxu0 0
    %169 = vmatpush1.bf16.msra.mxu0 %v48
    %170 = vmatprep.subr.bf16.mxu0 0
    %171 = vmatpush1.bf16.msra.mxu0 %v47
    %172 = vmatprep.subr.bf16.mxu0 0
    %173 = vmatpush2.bf16.msra.mxu0 0
    %174 = vmatprep.subr.bf16.mxu0 0
    %175 = vmatpush2.bf16.msra.mxu0 0
    %176 = vmatprep.subr.bf16.mxu0 0
    %177 = vmatpush2.bf16.msra.mxu0 0
    %178 = vmatprep.subr.bf16.mxu0 0
    %179 = vmatpush2.bf16.msra.mxu0 0
    %180 = vmatprep.subr.bf16.mxu0 0
    %181 = vmatpush2.bf16.msra.mxu0 0
    %182 = vmatprep.subr.bf16.mxu0 0
    %183 = vmatpush2.bf16.msra.mxu0 0
    %184 = vmatprep.subr.bf16.mxu0 0
    %185 = vmatpush2.bf16.msra.mxu0 0
    %186 = vmatprep.subr.bf16.mxu0 0
    %187 = vmatpush2.bf16.msra.mxu0 0
    %188 = vmatprep.mubr.bf16.mxu0 0
    %189 = vmatmul.mubr.bf16.gmra.mxu0 %v58
    %v190 = vpop.f32.mrf.mxu0
    %v191 = vadd.f32 %v154, %v190
    %v192 = vpop.f32.mrf.mxu0
    %v193 = vpop.f32.mrf.mxu0
    %v194 = vadd.f32 %v154, %v193
    %v195 = vpop.f32.mrf.mxu0
    %196 = vdwg.mxu0
    %v197 = vmul.f32 %v95, 0.5
    %v198 = vmul.f32 %v98, 0.5
    %v199 = vpack.c.bf16 %v197, %v197
    %v200 = vpack.c.bf16 %v198, %v198
    %v201 = vpack.c.bf16 %v143, %v143
    %v202 = vpack.c.bf16 %v146, %v146
    %v203 = vpack.c.bf16 %v191, %v191
    %v204 = vpack.c.bf16 %v194, %v194
    %vm205 = vcmask 31744
    %v207 = vsel %vm205, %v199, 0
    %v210 = vsel %vm205, %v201, 0
    %212 = vmatprep.subr.bf16.mxu0 0
    %213 = vmatpush1.bf16.xpose.msra.mxu0 0
    %214 = vmatprep.subr.bf16.mxu0 0
    %215 = vmatpush1.bf16.xpose.msra.mxu0 0
    %216 = vmatprep.subr.bf16.mxu0 0
    %217 = vmatpush1.bf16.xpose.msra.mxu0 0
    %218 = vmatprep.subr.bf16.mxu0 0
    %219 = vmatpush1.bf16.xpose.msra.mxu0 0
    %220 = vmatprep.subr.bf16.mxu0 0
    %221 = vmatpush1.bf16.xpose.msra.mxu0 0
    %222 = vmatprep.subr.bf16.mxu0 0
    %223 = vmatpush1.bf16.xpose.msra.mxu0 0
    %224 = vmatprep.subr.bf16.mxu0 0
    %225 = vmatpush1.bf16.xpose.msra.mxu0 0
    %226 = vmatprep.subr.bf16.mxu0 0
    %227 = vmatpush1.bf16.xpose.msra.mxu0 %v210
    %228 = vmatprep.subr.bf16.mxu0 0
    %229 = vmatpush2.bf16.xpose.msra.mxu0 0
    %230 = vmatprep.subr.bf16.mxu0 0
    %231 = vmatpush2.bf16.xpose.msra.mxu0 0
    %232 = vmatprep.subr.bf16.mxu0 0
    %233 = vmatpush2.bf16.xpose.msra.mxu0 0
    %234 = vmatprep.subr.bf16.mxu0 0
    %235 = vmatpush2.bf16.xpose.msra.mxu0 0
    %236 = vmatprep.subr.bf16.mxu0 0
    %237 = vmatpush2.bf16.xpose.msra.mxu0 0
    %238 = vmatprep.subr.bf16.mxu0 0
    %239 = vmatpush2.bf16.xpose.msra.mxu0 0
    %240 = vmatprep.subr.bf16.mxu0 0
    %241 = vmatpush2.bf16.xpose.msra.mxu0 0
    %242 = vmatprep.subr.bf16.mxu0 0
    %243 = vmatpush2.bf16.xpose.msra.mxu0 0
    %244 = vmatprep.mubr.bf16.mxu0 0
    %245 = vmatmul.mubr.bf16.gmra.mxu0 %v207
    %v246 = vpop.f32.mrf.mxu0
    %v247 = vadd.f32 0.0, %v246
    %v248 = vpop.f32.mrf.mxu0
    %v249 = vpop.f32.mrf.mxu0
    %v250 = vpop.f32.mrf.mxu0
    %251 = vdwg.mxu0
    %v253 = vsel %vm205, %v200, 0
    %v256 = vsel %vm205, %v202, 0
    %258 = vmatprep.subr.bf16.mxu0 0
    %259 = vmatpush1.bf16.xpose.msra.mxu0 0
    %260 = vmatprep.subr.bf16.mxu0 0
    %261 = vmatpush1.bf16.xpose.msra.mxu0 0
    %262 = vmatprep.subr.bf16.mxu0 0
    %263 = vmatpush1.bf16.xpose.msra.mxu0 0
    %264 = vmatprep.subr.bf16.mxu0 0
    %265 = vmatpush1.bf16.xpose.msra.mxu0 0
    %266 = vmatprep.subr.bf16.mxu0 0
    %267 = vmatpush1.bf16.xpose.msra.mxu0 0
    %268 = vmatprep.subr.bf16.mxu0 0
    %269 = vmatpush1.bf16.xpose.msra.mxu0 0
    %270 = vmatprep.subr.bf16.mxu0 0
    %271 = vmatpush1.bf16.xpose.msra.mxu0 0
    %272 = vmatprep.subr.bf16.mxu0 0
    %273 = vmatpush1.bf16.xpose.msra.mxu0 %v256
    %274 = vmatprep.subr.bf16.mxu0 0
    %275 = vmatpush2.bf16.xpose.msra.mxu0 0
    %276 = vmatprep.subr.bf16.mxu0 0
    %277 = vmatpush2.bf16.xpose.msra.mxu0 0
    %278 = vmatprep.subr.bf16.mxu0 0
    %279 = vmatpush2.bf16.xpose.msra.mxu0 0
    %280 = vmatprep.subr.bf16.mxu0 0
    %281 = vmatpush2.bf16.xpose.msra.mxu0 0
    %282 = vmatprep.subr.bf16.mxu0 0
    %283 = vmatpush2.bf16.xpose.msra.mxu0 0
    %284 = vmatprep.subr.bf16.mxu0 0
    %285 = vmatpush2.bf16.xpose.msra.mxu0 0
    %286 = vmatprep.subr.bf16.mxu0 0
    %287 = vmatpush2.bf16.xpose.msra.mxu0 0
    %288 = vmatprep.subr.bf16.mxu0 0
    %289 = vmatpush2.bf16.xpose.msra.mxu0 0
    %290 = vmatprep.mubr.bf16.mxu0 0
    %291 = vmatmul.mubr.bf16.gmra.mxu0 %v253
    %v292 = vpop.f32.mrf.mxu0
    %v293 = vadd.f32 0.0, %v292
    %v294 = vpop.f32.mrf.mxu0
    %v295 = vpop.f32.mrf.mxu0
    %v296 = vpop.f32.mrf.mxu0
    %297 = vdwg.mxu0
    %vm298 = vcmask 64512
    %v299 = vsel %vm298, %v247, -inf
    %300 = vmax.xlane.f32.xlu0 %v299
    %v301 = vpop.xlane.xlu0 %300
    %v302 = vsel %vm298, %v293, -inf
    %303 = vmax.xlane.f32.xlu0 %v302
    %v304 = vpop.xlane.xlu0 %303
    %v305 = vsub.f32 %v247, %v301
    %v306 = vsub.f32 %v293, %v304
    %v307 = vmul.f32 %v305, 1.442695
    %v308 = vpow.pop %v307
    %v309 = vmul.f32 %v306, 1.442695
    %v310 = vpow.pop %v309
    %v311 = vsel %vm298, %v308, 0.0
    %312 = vadd.xlane.f32.xlu0 %v311
    %v313 = vpop.xlane.xlu0 %312
    %v314 = vsel %vm298, %v310, 0.0
    %315 = vadd.xlane.f32.xlu0 %v314
    %v316 = vpop.xlane.xlu0 %315
    %v317 = vrcp.pop %v313
    %v318 = vrcp.pop %v316
    %v319 = vmul.f32 %v308, %v317
    %v320 = vmul.f32 %v310, %v318
    %v321 = vpack.c.bf16 %v319, %v319
    %v322 = vpack.c.bf16 %v320, %v320
    %v324 = vsel %vm298, %v321, 0
    %vm326 = vcmask 1043456
    %v328 = vsel %vm326, %v203, 0
    %330 = vmatprep.subr.bf16.mxu0 0
    %331 = vmatpush1.bf16.msra.mxu0 0
    %332 = vmatprep.subr.bf16.mxu0 0
    %333 = vmatpush1.bf16.msra.mxu0 0
    %334 = vmatprep.subr.bf16.mxu0 0
    %335 = vmatpush1.bf16.msra.mxu0 0
    %336 = vmatprep.subr.bf16.mxu0 0
    %337 = vmatpush1.bf16.msra.mxu0 0
    %338 = vmatprep.subr.bf16.mxu0 0
    %339 = vmatpush1.bf16.msra.mxu0 0
    %340 = vmatprep.subr.bf16.mxu0 0
    %341 = vmatpush1.bf16.msra.mxu0 0
    %342 = vmatprep.subr.bf16.mxu0 0
    %343 = vmatpush1.bf16.msra.mxu0 0
    %344 = vmatprep.subr.bf16.mxu0 0
    %345 = vmatpush1.bf16.msra.mxu0 %v328
    %346 = vmatprep.subr.bf16.mxu0 0
    %347 = vmatpush2.bf16.msra.mxu0 0
    %348 = vmatprep.subr.bf16.mxu0 0
    %349 = vmatpush2.bf16.msra.mxu0 0
    %350 = vmatprep.subr.bf16.mxu0 0
    %351 = vmatpush2.bf16.msra.mxu0 0
    %352 = vmatprep.subr.bf16.mxu0 0
    %353 = vmatpush2.bf16.msra.mxu0 0
    %354 = vmatprep.subr.bf16.mxu0 0
    %355 = vmatpush2.bf16.msra.mxu0 0
    %356 = vmatprep.subr.bf16.mxu0 0
    %357 = vmatpush2.bf16.msra.mxu0 0
    %358 = vmatprep.subr.bf16.mxu0 0
    %359 = vmatpush2.bf16.msra.mxu0 0
    %360 = vmatprep.subr.bf16.mxu0 0
    %361 = vmatpush2.bf16.msra.mxu0 0
    %362 = vmatprep.mubr.bf16.mxu0 0
    %363 = vmatmul.mubr.bf16.gmra.mxu0 %v324
    %v364 = vpop.f32.mrf.mxu0
    %v365 = vadd.f32 0.0, %v364
    %v366 = vpop.f32.mrf.mxu0
    %v367 = vpop.f32.mrf.mxu0
    %v368 = vpop.f32.mrf.mxu0
    %369 = vdwg.mxu0
    %v371 = vsel %vm298, %v322, 0
    %v374 = vsel %vm326, %v204, 0
    %376 = vmatprep.subr.bf16.mxu0 0
    %377 = vmatpush1.bf16.msra.mxu0 0
    %378 = vmatprep.subr.bf16.mxu0 0
    %379 = vmatpush1.bf16.msra.mxu0 0
    %380 = vmatprep.subr.bf16.mxu0 0
    %381 = vmatpush1.bf16.msra.mxu0 0
    %382 = vmatprep.subr.bf16.mxu0 0
    %383 = vmatpush1.bf16.msra.mxu0 0
    %384 = vmatprep.subr.bf16.mxu0 0
    %385 = vmatpush1.bf16.msra.mxu0 0
    %386 = vmatprep.subr.bf16.mxu0 0
    %387 = vmatpush1.bf16.msra.mxu0 0
    %388 = vmatprep.subr.bf16.mxu0 0
    %389 = vmatpush1.bf16.msra.mxu0 0
    %390 = vmatprep.subr.bf16.mxu0 0
    %391 = vmatpush1.bf16.msra.mxu0 %v374
    %392 = vmatprep.subr.bf16.mxu0 0
    %393 = vmatpush2.bf16.msra.mxu0 0
    %394 = vmatprep.subr.bf16.mxu0 0
    %395 = vmatpush2.bf16.msra.mxu0 0
    %396 = vmatprep.subr.bf16.mxu0 0
    %397 = vmatpush2.bf16.msra.mxu0 0
    %398 = vmatprep.subr.bf16.mxu0 0
    %399 = vmatpush2.bf16.msra.mxu0 0
    %400 = vmatprep.subr.bf16.mxu0 0
    %401 = vmatpush2.bf16.msra.mxu0 0
    %402 = vmatprep.subr.bf16.mxu0 0
    %403 = vmatpush2.bf16.msra.mxu0 0
    %404 = vmatprep.subr.bf16.mxu0 0
    %405 = vmatpush2.bf16.msra.mxu0 0
    %406 = vmatprep.subr.bf16.mxu0 0
    %407 = vmatpush2.bf16.msra.mxu0 0
    %408 = vmatprep.mubr.bf16.mxu0 0
    %409 = vmatmul.mubr.bf16.gmra.mxu0 %v371
    %v410 = vpop.f32.mrf.mxu0
    %v411 = vadd.f32 0.0, %v410
    %v412 = vpop.f32.mrf.mxu0
    %v413 = vpop.f32.mrf.mxu0
    %v414 = vpop.f32.mrf.mxu0
    %415 = vdwg.mxu0
    %416 = vst.msk [vmem:[#allocation2] sm:$0xff] %vm56, %v365
    %417 = vst.msk [vmem:[#allocation2 + $0x8] sm:$0xff] %vm56, %v411
    // Predicated region
    $region30: #{tpu_custom_call.1} parent=1 // pred_check
      _
    $region31: #{tpu_custom_call.1} parent=1 // pred_check_branch
      %419 = sbr.rel (0) target = $region33
    $region32: #{tpu_custom_call.1} parent=1 // pred_region
      %s421 = ssub.s32 256, 256
      %422 = vsyncadd [#allocation3], %s421
      %s423 = sshll.u32 [#allocation2], 4
      %s424 = int_to_ptr.vmem [resolvable:$true] %s423
      %429 = dma.vmem_to_hbm [thread:$0]  %s424, 256, %s7, [#allocation3], 128, 128, 8
    $region33: #{tpu_custom_call.1} parent=1 // pred_fallthru
      _
    // Predicated region
    $region34: #{tpu_custom_call.1} parent=1 // pred_check
      _
    $region35: #{tpu_custom_call.1} parent=1 // pred_check_branch
      %431 = sbr.rel (0) target = $region37
    $region36: #{tpu_custom_call.1} parent=1 // pred_region
      %432 = dma.done [#allocation3], 256
    $region37: #{tpu_custom_call.1} parent=1 // pred_fallthru
      _
    %433 = vsyncpa [#allocation3], 1

</llo_original>
